<compile_context>
chip_gen: v5e
topology: v5e:2x2
jax: 0.10.0
libtpu: 0.0.40
codegen_flags: <defaults>
</compile_context>

<pallas_src>
from functools import partial

import jax
import jax.numpy as jnp
from jax.experimental import pallas as pl
from jax.experimental.pallas import tpu as pltpu


def _round_up(x, m):
    return ((x + m - 1) // m) * m


def _pick_tile(dim, preferred, align):
    """Largest multiple of `align` <= `preferred` dividing `dim`; else full dim."""
    if dim <= preferred:
        return dim
    t = (preferred // align) * align
    while t >= align:
        if dim % t == 0:
            return t
        t -= align
    return dim


# ---------------------------------------------------------------------------
# Linear:  y = x @ w + b      x: (M, K), w: (K, N), b: (N,)
# ---------------------------------------------------------------------------
def _linear_kernel(x_ref, w_ref, b_ref, o_ref):
    acc = jax.lax.dot_general(
        x_ref[...], w_ref[...], (((1,), (0,)), ((), ())),
        preferred_element_type=jnp.float32)
    o_ref[...] = (acc + b_ref[...].astype(jnp.float32)).astype(o_ref.dtype)


def linear(x2d, w, b, out_dtype=None):
    M, K = x2d.shape
    K2, N = w.shape
    assert K == K2
    if out_dtype is None:
        out_dtype = x2d.dtype
    b2d = jnp.reshape(b, (1, N))          # bias stays in param/compute dtype; cast in-kernel

    tm = _pick_tile(M, 512, 8)            # big row tile: weights re-streamed less often
    tn = _pick_tile(N, 1024, 128)         # lane-dense (multiple-of-128) output tile

    return pl.pallas_call(
        _linear_kernel,
        out_shape=jax.ShapeDtypeStruct((M, N), out_dtype),
        grid=(M // tm, N // tn),
        in_specs=[
            pl.BlockSpec((tm, K), lambda i, j: (i, 0)),
            pl.BlockSpec((K, tn), lambda i, j: (0, j)),
            pl.BlockSpec((1, tn), lambda i, j: (0, j)),
        ],
        out_specs=pl.BlockSpec((tm, tn), lambda i, j: (i, j)),
        compiler_params=pltpu.CompilerParams(
            dimension_semantics=("parallel", "parallel"),
        ),
    )(x2d, w, b2d)


# ---------------------------------------------------------------------------
# Flash attention over a combined (B, Np, S, H, Dh) qkv tensor.
# q / k / v are slices along axis 2 (slot indices); heads are processed inside
# the kernel so the output block is a lane-dense (tq, C) stripe of (B, Np, C).
# ---------------------------------------------------------------------------
def _flash_attn_body(q_ref, k_ref, v_ref, o_ref, m_sc, l_sc, acc_sc, *,
                     scale, num_heads, head_dim, seq_len, block_k, mask_kv):
    j = pl.program_id(2)
    tq = q_ref.shape[0]
    tk = k_ref.shape[0]
    cdt = q_ref.dtype

    @pl.when(j == 0)
    def _():
        m_sc[...] = jnp.full(m_sc.shape, -jnp.inf, dtype=jnp.float32)
        l_sc[...] = jnp.zeros(l_sc.shape, dtype=jnp.float32)
        acc_sc[...] = jnp.zeros(acc_sc.shape, dtype=jnp.float32)

    if mask_kv:
        col = jax.lax.broadcasted_iota(jnp.int32, (tq, tk), 1)
        valid = (col + j * block_k) < seq_len

    for h in range(num_heads):
        # Scale q once per tile (tq*Dh muls) instead of the (tq, tk) scores.
        q = (q_ref[:, h:h + 1, :].reshape(tq, head_dim).astype(jnp.float32)
             * scale).astype(cdt)
        k = k_ref[:, h:h + 1, :].reshape(tk, head_dim)
        v = v_ref[:, h:h + 1, :].reshape(tk, head_dim)

        # Contraction over the last dim of both operands: no k.T relayout.
        s = jax.lax.dot_general(q, k, (((1,), (1,)), ((), ())),
                                preferred_element_type=jnp.float32)
        if mask_kv:
            s = jnp.where(valid, s, -1e30)

        m_prev = m_sc[h]
        m_new = jnp.maximum(m_prev, jnp.max(s, axis=-1, keepdims=True))
        alpha = jnp.exp(m_prev - m_new)
        p = jnp.exp(s - m_new)

        l_sc[h] = alpha * l_sc[h] + jnp.sum(p, axis=-1, keepdims=True)
        acc_sc[h] = alpha * acc_sc[h] + jax.lax.dot_general(
            p.astype(cdt), v, (((1,), (0,)), ((), ())),
            preferred_element_type=jnp.float32)
        m_sc[h] = m_new

    @pl.when(j == pl.num_programs(2) - 1)
    def _():
        for h in range(num_heads):
            out_h = acc_sc[h] * pl.reciprocal(l_sc[h], approx=True)
            o_ref[:, h * head_dim:(h + 1) * head_dim] = out_h.astype(o_ref.dtype)


def _flash_kernel(q_ref, k_ref, v_ref, o_ref, m_sc, l_sc, acc_sc, **kw):
    _flash_attn_body(q_ref, k_ref, v_ref, o_ref, m_sc, l_sc, acc_sc, **kw)


def _flash_kernel_shared_kv(q_ref, kv_ref, o_ref, m_sc, l_sc, acc_sc, **kw):
    # q = arbitrary slot, k = v = the same slot -> single k/v DMA stream.
    _flash_attn_body(q_ref, kv_ref, kv_ref, o_ref, m_sc, l_sc, acc_sc, **kw)


def flash_attention(qkv5, scale, *, seq_len, tq, tk, slots, out_dtype=None):
    B, Np, S, H, Dh = qkv5.shape
    C = H * Dh
    if out_dtype is None:
        out_dtype = qkv5.dtype
    q_slot, k_slot, v_slot = slots
    mask_kv = (Np != seq_len)

    kw = dict(scale=float(scale), num_heads=H, head_dim=Dh,
              seq_len=seq_len, block_k=tk, mask_kv=mask_kv)

    q_spec = pl.BlockSpec((None, tq, None, H, Dh),
                          lambda b, i, j, s=q_slot: (b, i, s, 0, 0))
    k_spec = pl.BlockSpec((None, tk, None, H, Dh),
                          lambda b, i, j, s=k_slot: (b, j, s, 0, 0))
    v_spec = pl.BlockSpec((None, tk, None, H, Dh),
                          lambda b, i, j, s=v_slot: (b, j, s, 0, 0))

    if k_slot == v_slot:
        kernel = partial(_flash_kernel_shared_kv, **kw)
        in_specs = [q_spec, k_spec]
        operands = (qkv5, qkv5)
    else:
        kernel = partial(_flash_kernel, **kw)
        in_specs = [q_spec, k_spec, v_spec]
        operands = (qkv5, qkv5, qkv5)

    return pl.pallas_call(
        kernel,
        out_shape=jax.ShapeDtypeStruct((B, Np, C), out_dtype),
        grid=(B, Np // tq, Np // tk),
        in_specs=in_specs,
        out_specs=pl.BlockSpec((None, tq, C), lambda b, i, j: (b, i, 0)),
        scratch_shapes=[
            pltpu.VMEM((H, tq, 1), jnp.float32),   # running max
            pltpu.VMEM((H, tq, 1), jnp.float32),   # running denominator
            pltpu.VMEM((H, tq, Dh), jnp.float32),  # output accumulator
        ],
        compiler_params=pltpu.CompilerParams(
            dimension_semantics=("parallel", "parallel", "arbitrary"),
        ),
    )(*operands)


# ---------------------------------------------------------------------------
# Module wrapper mirroring the PyTorch Attention module.
# ---------------------------------------------------------------------------
class Attention:
    def __init__(self, dim, num_heads=8, qkv_bias=False, qk_scale=None,
                 attn_drop=0.0, proj_drop=0.0, with_qkv=True,
                 key=None, param_dtype=jnp.float32, compute_dtype=jnp.bfloat16):
        self.dim = dim
        self.num_heads = num_heads
        head_dim = dim // num_heads
        self.scale = qk_scale or head_dim ** (-0.5)
        self.with_qkv = with_qkv
        self.compute_dtype = compute_dtype
        self.attn_drop_p = attn_drop   # TODO(synk): training-mode attn dropout not implemented (p=0 -> identity)
        self.proj_drop_p = proj_drop   # TODO(synk): training-mode proj dropout not implemented (p=0 -> identity)

        if key is None:
            key = jax.random.PRNGKey(0)
        if self.with_qkv:
            k1, k2, k3, k4 = jax.random.split(key, 4)
            init = 0.02
            self.w_qkv = (init * jax.random.normal(k1, (dim, 3 * dim))).astype(param_dtype)
            if qkv_bias:
                self.b_qkv = (init * jax.random.normal(k3, (3 * dim,))).astype(param_dtype)
            else:
                self.b_qkv = jnp.zeros((3 * dim,), param_dtype)
            self.w_proj = (init * jax.random.normal(k2, (dim, dim))).astype(param_dtype)
            self.b_proj = (init * jax.random.normal(k4, (dim,))).astype(param_dtype)

    def __call__(self, x, return_attn=False):
        if return_attn:
            # TODO(synk): return_attn=True needs the full NxN attention matrix,
            # which the flash kernel never materializes.
            raise NotImplementedError("return_attn=True is not supported")

        B, N, C = x.shape
        H = self.num_heads
        Dh = C // H
        cdt = self.compute_dtype

        # Sequence tiling: pad N up to a tile multiple; padded kv columns are
        # masked inside the kernel, padded q rows are sliced off at the end.
        tq = min(128, _round_up(N, 8))
        Np = _round_up(N, tq)
        tk = next(t for t in (256, 128, tq) if t <= Np and Np % t == 0)

        xc = x.astype(cdt)
        if Np != N:
            xc = jnp.pad(xc, ((0, 0), (0, Np - N), (0, 0)))

        if self.with_qkv:
            qkv = linear(xc.reshape(B * Np, C),
                         self.w_qkv.astype(cdt), self.b_qkv.astype(cdt))
            qkv5 = qkv.reshape(B, Np, 3, H, Dh)      # free reshape; no transposes
            slots = (0, 1, 2)
            attn_out_dtype = cdt
        else:
            qkv5 = xc.reshape(B, Np, 1, H, Dh)       # q = k = v; shared k/v DMA stream
            slots = (0, 0, 0)
            attn_out_dtype = x.dtype

        out = flash_attention(qkv5, self.scale, seq_len=N, tq=tq, tk=tk,
                              slots=slots, out_dtype=attn_out_dtype)   # (B, Np, C)

        if self.with_qkv:
            out = linear(out.reshape(B * Np, C),
                         self.w_proj.astype(cdt), self.b_proj.astype(cdt),
                         out_dtype=x.dtype)
            out = out.reshape(B, Np, C)

        if Np != N:
            out = out[:, :N, :]
        return out


# ---------------------------------------------------------------------------
# Pure-JAX reference (f32 math on compute-dtype-rounded inputs / weights).
# ---------------------------------------------------------------------------
def _reference(x, module):
    cdt = module.compute_dtype
    f32 = jnp.float32
    xr = x.astype(cdt).astype(f32)
    B, N, C = x.shape
    H = module.num_heads
    Dh = C // H
    if module.with_qkv:
        w_qkv = module.w_qkv.astype(cdt).astype(f32)
        b_qkv = module.b_qkv.astype(cdt).astype(f32)
        qkv = xr @ w_qkv + b_qkv
        qkv = qkv.reshape(B, N, 3, H, Dh).transpose(2, 0, 3, 1, 4)
        q, k, v = qkv[0], qkv[1], qkv[2]
    else:
        q = xr.reshape(B, N, H, Dh).transpose(0, 2, 1, 3)
        k = v = q
    attn = jnp.einsum("bhqd,bhkd->bhqk", q, k) * module.scale
    attn = jax.nn.softmax(attn, axis=-1)
    out = jnp.einsum("bhqk,bhkd->bhqd", attn, v)
    out = out.transpose(0, 2, 1, 3).reshape(B, N, C)
    if module.with_qkv:
        out = out @ module.w_proj.astype(cdt).astype(f32) \
              + module.b_proj.astype(cdt).astype(f32)
    return out


if __name__ == "__main__":
    key = jax.random.PRNGKey(0)
    kx, kp, kx2 = jax.random.split(key, 3)

    B, N, C, H = 2, 8, 32, 8          # head_dim = 4
    x = jax.random.normal(kx, (B, N, C), dtype=jnp.float32)

    # Main path: qkv projection + flash attention + output projection (bf16 MXU).
    attn = Attention(dim=C, num_heads=H, qkv_bias=True, with_qkv=True, key=kp)
    out = jax.block_until_ready(attn(x))
    ref = _reference(x, attn)
    assert out.shape == (B, N, C)
    err = float(jnp.max(jnp.abs(out - ref)))
    assert bool(jnp.allclose(out, ref, rtol=2e-2, atol=2e-2)), \
        "with_qkv mismatch, max abs err = %f" % err

    # Secondary path: with_qkv=False (q = k = v = reshaped input).
    attn_noqkv = Attention(dim=C, num_heads=H, with_qkv=False, key=kp)
    out2 = jax.block_until_ready(attn_noqkv(x))
    ref2 = _reference(x, attn_noqkv)
    err2 = float(jnp.max(jnp.abs(out2 - ref2)))
    assert bool(jnp.allclose(out2, ref2, rtol=2e-2, atol=2e-2)), \
        "no-qkv mismatch, max abs err = %f" % err2

    # Ragged sequence length exercises the padding + in-kernel kv-mask path.
    N2 = 10
    x2 = jax.random.normal(kx2, (B, N2, C), dtype=jnp.float32)
    attn_ragged = Attention(dim=C, num_heads=H, qkv_bias=False, with_qkv=True, key=kp)
    out3 = jax.block_until_ready(attn_ragged(x2))
    ref3 = _reference(x2, attn_ragged)
    assert out3.shape == (B, N2, C)
    err3 = float(jnp.max(jnp.abs(out3 - ref3)))
    assert bool(jnp.allclose(out3, ref3, rtol=2e-2, atol=2e-2)), \
        "masked mismatch, max abs err = %f" % err3

    print("KERNEL_OK")
</pallas_src>

<mosaic_0001>
module attributes {stable_mosaic.version = 11 : i64} {
  func.func @_linear_kernel(%arg0: i32, %arg1: i32, %arg2: memref<16x32xbf16, #tpu.memory_space<vmem>>, %arg3: memref<32x96xbf16, #tpu.memory_space<vmem>>, %arg4: memref<1x96xbf16, #tpu.memory_space<vmem>>, %arg5: memref<16x96xbf16, #tpu.memory_space<vmem>>) attributes {dimension_semantics = [#tpu.dimension_semantics<parallel>, #tpu.dimension_semantics<parallel>], iteration_bounds = array<i64: 1, 1>, scalar_prefetch = 0 : i64, scratch_operands = 0 : i64, tpu.core_type = #tpu.core_type<tc>, window_params = [{transform_indices = @transform_0, window_bounds = array<i64: 16, 32>}, {transform_indices = @transform_1, window_bounds = array<i64: 32, 96>}, {transform_indices = @transform_2, window_bounds = array<i64: 1, 96>}, {transform_indices = @transform_3, window_bounds = array<i64: 16, 96>}]} {
    %c0 = arith.constant 0 : index
    %c0_0 = arith.constant 0 : index
    %0 = vector.load %arg2[%c0, %c0_0] : memref<16x32xbf16, #tpu.memory_space<vmem>>, vector<16x32xbf16>
    %c0_1 = arith.constant 0 : index
    %c0_2 = arith.constant 0 : index
    %1 = vector.load %arg3[%c0_1, %c0_2] : memref<32x96xbf16, #tpu.memory_space<vmem>>, vector<32x96xbf16>
    %cst = arith.constant dense<0.000000e+00> : vector<16x96xf32>
    %2 = tpu.matmul %0, %1, %cst {dimension_numbers = #tpu.dot_dimension_numbers<[1], [0], [0], [1], [0, 0, 1, 1], [], []>} : vector<16x32xbf16>, vector<32x96xbf16>, vector<16x96xf32> -> vector<16x96xf32>
    %c0_3 = arith.constant 0 : index
    %c0_4 = arith.constant 0 : index
    %3 = vector.load %arg4[%c0_3, %c0_4] : memref<1x96xbf16, #tpu.memory_space<vmem>>, vector<1x96xbf16>
    %4 = arith.extf %3 : vector<1x96xbf16> to vector<1x96xf32>
    %5 = vector.broadcast %4 : vector<1x96xf32> to vector<16x96xf32>
    %6 = arith.addf %2, %5 : vector<16x96xf32>
    %7 = arith.truncf %6 : vector<16x96xf32> to vector<16x96xbf16>
    %c0_5 = arith.constant 0 : index
    %c0_6 = arith.constant 0 : index
    %8 = vector.load %arg5[%c0_5, %c0_6] : memref<16x96xbf16, #tpu.memory_space<vmem>>, vector<16x96xbf16>
    tpu.vector_store %arg5[%c0_5, %c0_6], %7 {strides = array<i32>} : memref<16x96xbf16, #tpu.memory_space<vmem>>, vector<16x96xbf16>,
    return
  }
  func.func @transform_0(%arg0: i32, %arg1: i32) -> (i32, i32) {
    %c0_i32 = arith.constant 0 : i32
    %c0_i32_0 = arith.constant 0 : i32
    return %arg0, %c0_i32 : i32, i32
  }
  func.func @transform_1(%arg0: i32, %arg1: i32) -> (i32, i32) {
    %c0_i32 = arith.constant 0 : i32
    %c0_i32_0 = arith.constant 0 : i32
    return %c0_i32, %arg1 : i32, i32
  }
  func.func @transform_2(%arg0: i32, %arg1: i32) -> (i32, i32) {
    %c0_i32 = arith.constant 0 : i32
    %c0_i32_0 = arith.constant 0 : i32
    return %c0_i32, %arg1 : i32, i32
  }
  func.func @transform_3(%arg0: i32, %arg1: i32) -> (i32, i32) {
    %c0_i32 = arith.constant 0 : i32
    return %arg0, %arg1 : i32, i32
  }
}

</mosaic_0001>

<llo_original>
// kernel: tpu_custom_call.1
$region0: #{tpu_custom_call.1}
  #allocation0 [shape = 'u32[]', space=smem, size = 0x4, offset = 0x4, fixed_abs, tag = 'smem constant byte address 0x4 - core index']
  #allocation1 [shape = 'u32[72,128]{1,0:T(1,128)}', space=vmem, size = 0x9000, scoped, tag = 'internal scratch']
  %s0 = inlined_call_operand.hbm [shape: bf16[16,32], index: 0, kind: input, shape index: {}]
  %s1 = inlined_call_operand.hbm [shape: bf16[32,96], index: 1, kind: input, shape index: {}]
  %s2 = inlined_call_operand.vmem [shape: bf16[1,96], index: 2, kind: input, shape index: {}]
  %s3 = inlined_call_operand.hbm [shape: bf16[16,96], index: 3, kind: output, shape index: {}]
  %s4 = sld [smem:[#allocation0]]
  $region30: #{tpu_custom_call.1} parent=0
    _
  %s6 = ssub.s32 1, %s4
  %s7 = scalar_select 0, %s6, %s4
  $region1: #{tpu_custom_call.1} parent=0
    #allocation2 [shape = 'u8[4096]{0}', space=vmem, size = 0x1000, scoped, tag = 'input window, operand 0, single buffered']
    #allocation3 [shape = 's32[1]{0}', space=sflag, size = 0x4, scoped, tag = 'scoped memory for tpu_custom_call.1']
    #allocation4 [shape = 's32[1]{0}', space=sflag, size = 0x4, scoped, tag = 'scoped memory for tpu_custom_call.1']
    #allocation5 [shape = 'u8[8192]{0}', space=vmem, size = 0x2000, scoped, tag = 'input window, operand 1, single buffered']
    #allocation6 [shape = 's32[1]{0}', space=sflag, size = 0x4, scoped, tag = 'scoped memory for tpu_custom_call.1']
    #allocation7 [shape = 'u8[4096]{0}', space=vmem, size = 0x1000, scoped, tag = 'output window, operand 0, single buffered']
    %8 = vsyncpa [#allocation3], 0
    %9 = vsyncpa [#allocation6], 0
    %10 = vsyncpa [#allocation4], 0
    // Predicated region
    $region2: #{tpu_custom_call.1} parent=1 // pred_check
      _
    $region3: #{tpu_custom_call.1} parent=1 // pred_check_branch
      %12 = sbr.rel (0) target = $region5
    $region4: #{tpu_custom_call.1} parent=1 // pred_region
      %14 = vsyncadd [#allocation3], 0
      %s15 = sshll.u32 %s0, 4
      %s16 = int_to_ptr.hbm [resolvable:$true] %s15
      %s17 = sshll.u32 [#allocation2], 4
      %s18 = int_to_ptr.vmem [resolvable:$true] %s17
      %23 = dma.hbm_to_vmem [thread:$0]  %s16, 128, %s18, [#allocation3], 64, 64, 4
    $region5: #{tpu_custom_call.1} parent=1 // pred_fallthru
      _
    // Predicated region
    $region6: #{tpu_custom_call.1} parent=1 // pred_check
      _
    $region7: #{tpu_custom_call.1} parent=1 // pred_check_branch
      %25 = sbr.rel (0) target = $region9
    $region8: #{tpu_custom_call.1} parent=1 // pred_region
      %27 = vsyncadd [#allocation6], 0
      %s28 = sshll.u32 %s1, 4
      %s29 = int_to_ptr.hbm [resolvable:$true] %s28
      %s30 = sshll.u32 [#allocation5], 4
      %s31 = int_to_ptr.vmem [resolvable:$true] %s30
      %36 = dma.hbm_to_vmem [thread:$0]  %s29, 256, %s31, [#allocation6], 64, 64, 4
    $region9: #{tpu_custom_call.1} parent=1 // pred_fallthru
      _
    // Predicated region
    $region10: #{tpu_custom_call.1} parent=1 // pred_check
      _
    $region11: #{tpu_custom_call.1} parent=1 // pred_check_branch
      %38 = sbr.rel (0) target = $region13
    $region12: #{tpu_custom_call.1} parent=1 // pred_region
      _
    $region13: #{tpu_custom_call.1} parent=1 // pred_fallthru
      _
    // Predicated region
    $region14: #{tpu_custom_call.1} parent=1 // pred_check
      _
    $region15: #{tpu_custom_call.1} parent=1 // pred_check_branch
      %40 = sbr.rel (0) target = $region17
    $region16: #{tpu_custom_call.1} parent=1 // pred_region
      %42 = dma.done [#allocation3], 128
    $region17: #{tpu_custom_call.1} parent=1 // pred_fallthru
      _
    // Predicated region
    $region18: #{tpu_custom_call.1} parent=1 // pred_check
      _
    $region19: #{tpu_custom_call.1} parent=1 // pred_check_branch
      %44 = sbr.rel (0) target = $region21
    $region20: #{tpu_custom_call.1} parent=1 // pred_region
      %46 = dma.done [#allocation6], 256
    $region21: #{tpu_custom_call.1} parent=1 // pred_fallthru
      _
    %v48 = vld [vmem:[#allocation2] sm:$0xf]
    %v49 = vld [vmem:[#allocation2 + $0x4] sm:$0xf]
    %v50 = vld [vmem:[#allocation5] sm:$0xf]
    %v51 = vld [vmem:[#allocation5 + $0x4] sm:$0xf]
    %v52 = vld [vmem:[#allocation5 + $0x8] sm:$0xf]
    %v53 = vld [vmem:[#allocation5 + $0xc] sm:$0xf]
    %v54 = vld [vmem:[%s2] sm:$0x1]
    %v55 = vunpack.c.l.bf16 %v54
    %v56 = vperm.slane %v55, 0
    %v59 = vunpack.c.l.b16 %v48
    %v60 = vunpack.c.l.b16 %v49
    %v61 = vpack.c.b16 %v60, %v59
    %v66 = vunpack.c.l.b16 %v50
    %v67 = vunpack.c.l.b16 %v51
    %v68 = vunpack.c.l.b16 %v52
    %v69 = vunpack.c.l.b16 %v53
    %v70 = vpack.c.b16 %v67, %v66
    %v71 = vpack.c.b16 %v69, %v68
    %vm74 = vcmask 261120
    %v76 = vsel %vm74, %v61, 0
    %78 = vmatpush.bf16.msra.mxu0 0
    %79 = vmatpush.bf16.msra.mxu0 0
    %80 = vmatpush.bf16.msra.mxu0 0
    %81 = vmatpush.bf16.msra.mxu0 0
    %82 = vmatpush.bf16.msra.mxu0 0
    %83 = vmatpush.bf16.msra.mxu0 0
    %84 = vmatpush.bf16.msra.mxu0 %v71
    %85 = vmatpush.bf16.msra.mxu0 %v70
    %86 = vmatmul.bf16.gmra.mxu0 %v76
    %v87 = vpop.f32.mrf.mxu0
    %v88 = vadd.f32 %v56, %v87
    %v89 = vpop.f32.mrf.mxu0
    %v90 = vadd.f32 %v56, %v89
    %91 = vdwg.mxu0
    %v92 = vpack.c.bf16 %v88, %v88
    %v93 = vpack.c.bf16 %v90, %v90
    %vm94 = vcmask 781312
    %95 = vst.msk [vmem:[#allocation7] sm:$0xf] %vm94, %v92
    %96 = vst.msk [vmem:[#allocation7 + $0x4] sm:$0xf] %vm94, %v93
    // Predicated region
    $region22: #{tpu_custom_call.1} parent=1 // pred_check
      _
    $region23: #{tpu_custom_call.1} parent=1 // pred_check_branch
      %98 = sbr.rel (0) target = $region25
    $region24: #{tpu_custom_call.1} parent=1 // pred_region
      %100 = vsyncadd [#allocation4], 0
      %s101 = sshll.u32 [#allocation7], 4
      %s102 = int_to_ptr.vmem [resolvable:$true] %s101
      %s103 = sshll.u32 %s3, 4
      %s104 = int_to_ptr.hbm [resolvable:$true] %s103
      %109 = dma.vmem_to_hbm [thread:$0]  %s102, 128, %s104, [#allocation4], 64, 64, 4
    $region25: #{tpu_custom_call.1} parent=1 // pred_fallthru
      _
    // Predicated region
    $region26: #{tpu_custom_call.1} parent=1 // pred_check
      _
    $region27: #{tpu_custom_call.1} parent=1 // pred_check_branch
      %111 = sbr.rel (0) target = $region29
    $region28: #{tpu_custom_call.1} parent=1 // pred_region
      %113 = dma.done [#allocation4], 128
    $region29: #{tpu_custom_call.1} parent=1 // pred_fallthru
      _
    %114 = vsyncpa [#allocation3], 1
    %115 = vsyncpa [#allocation6], 1
    %116 = vsyncpa [#allocation4], 1

</llo_original>
